<compile_context>
chip_gen: v5e
topology: v5e:2x2
jax: 0.10.0
libtpu: 0.0.40
codegen_flags: <defaults>
</compile_context>

<pallas_src>
import jax
import jax.numpy as jnp
import numpy as np
from jax.experimental import pallas as pl
from jax.experimental.pallas import tpu as pltpu


def _scale_relu_kernel(z_ref, o_ref):
    # y = relu(relu(z)); y + y   ==   2 * relu(z)
    # Compute in f32 even for bf16 I/O (v5e VPU has no bf16 path).
    v = z_ref[...].astype(jnp.float32)
    o_ref[...] = (2.0 * jnp.maximum(v, 0.0)).astype(o_ref.dtype)


def _double_relu_flat(flat, *, lane=512, max_rows=512):
    """Apply 2*relu elementwise to a 1-D array via a row-tiled, lane-dense
    Pallas kernel.  Returns a 1-D array of the same length/dtype."""
    n = flat.shape[0]

    # Lane-dense last dim: multiple of 128 (512 for non-tiny inputs).
    lane = lane if n >= lane else 128
    n_pad = ((n + lane - 1) // lane) * lane
    if n_pad != n:
        flat = jnp.pad(flat, (0, n_pad - n))
    rows = n_pad // lane
    mat = flat.reshape(rows, lane)

    # Row tile: full array if small, otherwise 512 rows (multiple of 8).
    # 512 x 512 f32 = 1 MiB/block -> 4 MiB with in+out double-buffering,
    # comfortably inside v7x's 32 MiB scoped VMEM default.
    tile_r = rows if rows <= max_rows else max_rows
    grid = (pl.cdiv(rows, tile_r),)

    out_mat = pl.pallas_call(
        _scale_relu_kernel,
        out_shape=jax.ShapeDtypeStruct((rows, lane), flat.dtype),
        grid=grid,
        in_specs=[pl.BlockSpec((tile_r, lane), lambda i: (i, 0))],
        out_specs=pl.BlockSpec((tile_r, lane), lambda i: (i, 0)),
        compiler_params=pltpu.CompilerParams(
            dimension_semantics=("parallel",)),
    )(mat)

    return out_mat.reshape(-1)[:n]


@jax.jit
def model_forward(x, y=None, z=None):
    # y and z match the PyTorch signature but are unused (the reference
    # forward overwrites both before use).
    B, C, W = x.shape

    # Layout plumbing, mirroring x.transpose(1,2).view(B,C,-1).transpose(1,2).
    # ReLU commutes with this pure permutation, so it is applied in the
    # kernel; XLA fuses these three ops into a single copy.
    t = jnp.transpose(x, (0, 2, 1))      # (B, W, C)
    v = t.reshape(B, C, -1)              # (B, C, W)  -- contiguous .view semantics
    zz = jnp.transpose(v, (0, 2, 1))     # (B, W, C)

    out_flat = _double_relu_flat(zz.reshape(-1))
    return out_flat.reshape(B, W, C)


def _reference(x):
    # Pure-JAX reference following the PyTorch op order literally.
    B, C, _ = x.shape
    t = jnp.transpose(x, (0, 2, 1))
    r = jnp.maximum(t, 0.0)
    v = r.reshape(B, C, -1)
    zz = jnp.transpose(v, (0, 2, 1))
    y = jnp.maximum(zz, 0.0)
    return y + y


if __name__ == "__main__":
    key = jax.random.PRNGKey(0)
    kx, ky, kz = jax.random.split(key, 3)
    x = jax.random.normal(kx, (2, 3, 4), dtype=jnp.float32)
    y_in = jax.random.normal(ky, (2, 5), dtype=jnp.float32)
    z_in = jax.random.normal(kz, (2, 3, 4), dtype=jnp.float32)

    out = jax.block_until_ready(model_forward(x, y_in, z_in))
    ref = jax.block_until_ready(_reference(x))

    assert out.shape == (2, 4, 3), out.shape
    assert np.allclose(np.asarray(out), np.asarray(ref), atol=1e-6, rtol=1e-6)

    # Also exercise the row-tiled multi-step grid path once (larger shape).
    xb = jax.random.normal(kx, (8, 96, 128), dtype=jnp.float32)
    out_b = jax.block_until_ready(model_forward(xb))
    ref_b = jax.block_until_ready(_reference(xb))
    assert out_b.shape == ref_b.shape
    assert np.allclose(np.asarray(out_b), np.asarray(ref_b), atol=1e-6, rtol=1e-6)

    print("KERNEL_OK")
</pallas_src>

<mosaic_0001>
module attributes {stable_mosaic.version = 11 : i64} {
  func.func @_scale_relu_kernel(%arg0: i32, %arg1: memref<1x128xf32, #tpu.memory_space<vmem>>, %arg2: memref<1x128xf32, #tpu.memory_space<vmem>>) attributes {dimension_semantics = [#tpu.dimension_semantics<parallel>], iteration_bounds = array<i64: 1>, scalar_prefetch = 0 : i64, scratch_operands = 0 : i64, tpu.core_type = #tpu.core_type<tc>, window_params = [{transform_indices = @transform_0, window_bounds = array<i64: 1, 128>}, {transform_indices = @transform_1, window_bounds = array<i64: 1, 128>}]} {
    %c0 = arith.constant 0 : index
    %c0_0 = arith.constant 0 : index
    %0 = vector.load %arg1[%c0, %c0_0] : memref<1x128xf32, #tpu.memory_space<vmem>>, vector<1x128xf32>
    %cst = arith.constant 0.000000e+00 : f32
    %1 = vector.broadcast %cst : f32 to vector<1x128xf32>
    %2 = arith.maximumf %0, %1 : vector<1x128xf32>
    %cst_1 = arith.constant 2.000000e+00 : f32
    %3 = vector.broadcast %cst_1 : f32 to vector<1x128xf32>
    %4 = arith.mulf %3, %2 : vector<1x128xf32>
    %c0_2 = arith.constant 0 : index
    %c0_3 = arith.constant 0 : index
    %5 = vector.load %arg2[%c0_2, %c0_3] : memref<1x128xf32, #tpu.memory_space<vmem>>, vector<1x128xf32>
    tpu.vector_store %arg2[%c0_2, %c0_3], %4 {strides = array<i32>} : memref<1x128xf32, #tpu.memory_space<vmem>>, vector<1x128xf32>,
    return
  }
  func.func @transform_0(%arg0: i32) -> (i32, i32) {
    %c0_i32 = arith.constant 0 : i32
    %c0_i32_0 = arith.constant 0 : i32
    return %arg0, %c0_i32 : i32, i32
  }
  func.func @transform_1(%arg0: i32) -> (i32, i32) {
    %c0_i32 = arith.constant 0 : i32
    %c0_i32_0 = arith.constant 0 : i32
    return %arg0, %c0_i32 : i32, i32
  }
}

</mosaic_0001>

<llo_original>
// kernel: model_forward.1
$region0: #{model_forward.1}
  #allocation0 [shape = 'u32[]', space=smem, size = 0x4, offset = 0x4, fixed_abs, tag = 'smem constant byte address 0x4 - core index']
  #allocation1 [shape = 'u32[72,128]{1,0:T(1,128)}', space=vmem, size = 0x9000, scoped, tag = 'internal scratch']
  %s0 = inlined_call_operand.vmem [shape: f32[1,128], index: 0, kind: input, shape index: {}]
  %s1 = inlined_call_operand.vmem [shape: f32[1,128], index: 1, kind: output, shape index: {}]
  %s2 = sld [smem:[#allocation0]]
  $region14: #{model_forward.1} parent=0
    _
  %s4 = ssub.s32 1, %s2
  %s5 = scalar_select 0, %s4, %s2
  // Predicated region
  $region2: #{model_forward.1} parent=0 // pred_check
    _
  $region3: #{model_forward.1} parent=0 // pred_check_branch
    %7 = sbr.rel (0) target = $region5
  $region4: #{model_forward.1} parent=0 // pred_region
    _
  $region5: #{model_forward.1} parent=0 // pred_fallthru
    _
  %v8 = vld [vmem:[%s0] sm:$0x1]
  %v9 = vmax.f32 %v8, 0.0
  %v10 = vmul.f32 %v9, 2.0
  %11 = vst [vmem:[%s1] sm:$0x1] %v10
  // Predicated region
  $region6: #{model_forward.1} parent=0 // pred_check
    _
  $region7: #{model_forward.1} parent=0 // pred_check_branch
    %13 = sbr.rel (0) target = $region9
  $region8: #{model_forward.1} parent=0 // pred_region
    _
  $region9: #{model_forward.1} parent=0 // pred_fallthru
    _
  // Predicated region
  $region10: #{model_forward.1} parent=0 // pred_check
    _
  $region11: #{model_forward.1} parent=0 // pred_check_branch
    %15 = sbr.rel (0) target = $region13
  $region12: #{model_forward.1} parent=0 // pred_region
    _
  $region13: #{model_forward.1} parent=0 // pred_fallthru
    _

</llo_original>
